<compile_context>
chip_gen: v6e
topology: v6e:2x2x1
jax: 0.10.0
libtpu: 0.0.40
codegen_flags: <defaults>
</compile_context>

<pallas_src>
import functools

import jax
import jax.numpy as jnp
from jax import lax
from jax.experimental import pallas as pl
from jax.experimental.pallas import tpu as pltpu

KH = KW = 4
PAD = 1
EPS = 1e-5
NEG_SLOPE = 0.2
LANE = 128


def _ceil_to(x, m):
    return (x + m - 1) // m * m


def _vmem_limit_bytes():
    try:
        cap = int(pltpu.get_tpu_info().vmem_capacity_bytes)
    except Exception:
        cap = 64 * 1024 * 1024
    return (cap * 3) // 4          # leave headroom for Mosaic internal scratch


# --------------------------------------------------------------------------- kernels
def _fused_conv_in_lrelu_kernel(patches_ref, w_ref, o_ref, *, p_valid):
    """One sample: conv-as-matmul + instance-norm + LeakyReLU, y stays in VMEM."""
    # patches_ref: (P_pad, K) bf16   w_ref: (K, Cpad) bf16   o_ref: (P_pad, Cpad) f32
    y = jnp.dot(patches_ref[...], w_ref[...], preferred_element_type=jnp.float32)
    # Padded rows / padded output channels are exactly zero (no bias), so plain sums
    # over the padded block give correct statistics once divided by p_valid.
    s = jnp.sum(y, axis=0, keepdims=True)
    sq = jnp.sum(y * y, axis=0, keepdims=True)
    mean = s * (1.0 / p_valid)
    var = jnp.maximum(sq * (1.0 / p_valid) - mean * mean, 0.0)   # biased, like IN2d
    inv = lax.rsqrt(var + EPS)
    yn = (y - mean) * inv
    o_ref[...] = jnp.where(yn >= 0.0, yn, NEG_SLOPE * yn).astype(o_ref.dtype)


def _conv_stats_kernel(patches_ref, w_ref, y_ref, psum_ref, psq_ref):
    """Tiled pass 1: matmul + per-tile IN partial stats; y stored in bf16."""
    y = jnp.dot(patches_ref[...], w_ref[...], preferred_element_type=jnp.float32)
    y_ref[...] = y.astype(y_ref.dtype)
    psum_ref[...] = jnp.sum(y, axis=0, keepdims=True)
    psq_ref[...] = jnp.sum(y * y, axis=0, keepdims=True)


def _norm_lrelu_kernel(y_ref, scale_ref, shift_ref, o_ref):
    """Tiled pass 2: fused normalize (y*scale + shift) + LeakyReLU(0.2)."""
    yn = y_ref[...].astype(jnp.float32) * scale_ref[...] + shift_ref[...]
    o_ref[...] = jnp.where(yn >= 0.0, yn, NEG_SLOPE * yn).astype(o_ref.dtype)


# --------------------------------------------------------------------------- wrapper
def _im2col(x_nchw, stride):
    """(N, Cin, H, W) -> patches (N, P, K), K ordered (kh, kw, cin)."""
    n, cin, h, w = x_nchw.shape
    x = jnp.transpose(x_nchw, (0, 2, 3, 1))                    # NHWC
    x = jnp.pad(x, ((0, 0), (PAD, PAD), (PAD, PAD), (0, 0)))
    h_out = (h + 2 * PAD - KH) // stride + 1
    w_out = (w + 2 * PAD - KW) // stride + 1
    cols = []
    for kh in range(KH):
        for kw in range(KW):
            cols.append(x[:, kh:kh + stride * (h_out - 1) + 1:stride,
                             kw:kw + stride * (w_out - 1) + 1:stride, :])
    patches = jnp.stack(cols, axis=3)                           # (N, Ho, Wo, 16, Cin)
    return patches.reshape(n, h_out * w_out, KH * KW * cin), h_out, w_out


@functools.partial(jax.jit, static_argnames=("stride", "force_tiled"))
def conv_layer_forward(x_nchw, weight, bias, *, stride, force_tiled=False):
    """ConvLayer.forward: (N, Cin, H, W) -> (N, Cout, Ho, Wo).

    `bias` is accepted for API parity with nn.Conv2d but unused: a per-channel bias
    is exactly cancelled by InstanceNorm2d(affine=False).
    """
    del bias
    n, cin, _, _ = x_nchw.shape
    cout = weight.shape[0]
    k = cin * KH * KW
    out_dtype = x_nchw.dtype

    # im2col in bf16 (bf16-native MXU operand, half the HBM bytes of the dominant
    # inflated patch stream).  K is NOT padded to 128.
    patches, h_out, w_out = _im2col(x_nchw.astype(jnp.bfloat16), stride)
    p = h_out * w_out
    cpad = _ceil_to(cout, LANE)                                 # lane-dense stores

    vmem_limit = _vmem_limit_bytes()

    # Weight (K, Cpad) bf16, K ordered (kh, kw, cin) to match the patch columns.
    w_mat = jnp.transpose(weight, (0, 2, 3, 1)).reshape(cout, k).T.astype(jnp.bfloat16)
    w_mat = jnp.pad(w_mat, ((0, 0), (0, cpad - cout)))

    p8 = _ceil_to(p, 8)
    fused_bytes = (2 * p8 * k * 2 + 2 * k * cpad * 2            # patches + weight (dbl-buf)
                   + 2 * p8 * cpad * 4                          # f32 output (dbl-buf)
                   + 3 * p8 * cpad * 4)                         # y / yn / temps
    use_fused = (not force_tiled) and fused_bytes <= (vmem_limit * 3) // 4

    if use_fused:
        # ---------------- fully fused: one pallas_call, no y round-trip -------------
        p_pad = p8
        if p_pad != p:
            patches = jnp.pad(patches, ((0, 0), (0, p_pad - p), (0, 0)))
        out = pl.pallas_call(
            functools.partial(_fused_conv_in_lrelu_kernel, p_valid=float(p)),
            out_shape=jax.ShapeDtypeStruct((n, p_pad, cpad), jnp.float32),
            grid_spec=pltpu.PrefetchScalarGridSpec(
                num_scalar_prefetch=0,
                grid=(n,),
                in_specs=[
                    pl.BlockSpec((None, p_pad, k), lambda i: (i, 0, 0)),
                    pl.BlockSpec((k, cpad), lambda i: (0, 0)),
                ],
                out_specs=pl.BlockSpec((None, p_pad, cpad), lambda i: (i, 0, 0)),
            ),
            compiler_params=pltpu.CompilerParams(
                dimension_semantics=("parallel",),
                vmem_limit_bytes=vmem_limit),
        )(patches, w_mat)
    else:
        # ---------------- tiled two-pass fallback (large P), bf16 y -----------------
        tile_cap = 1024 if k * cpad * 2 <= (2 << 20) else 512
        num_p = -(-p // tile_cap)
        tile_p = _ceil_to(-(-p // num_p), 8)
        p_pad = num_p * tile_p
        if p_pad != p:
            patches = jnp.pad(patches, ((0, 0), (0, p_pad - p), (0, 0)))

        w_spec = pl.BlockSpec((k, cpad), lambda i, j: (0, 0))
        if k * cpad * 2 >= (4 << 20):
            # Large resident weight: don't double-buffer it (v7x has 64 MiB VMEM).
            w_spec = pl.BlockSpec((k, cpad), lambda i, j: (0, 0),
                                  pipeline_mode=pl.Buffered(1))

        y, psum, psq = pl.pallas_call(
            _conv_stats_kernel,
            out_shape=(
                jax.ShapeDtypeStruct((n, p_pad, cpad), jnp.bfloat16),
                jax.ShapeDtypeStruct((n, num_p, 1, cpad), jnp.float32),
                jax.ShapeDtypeStruct((n, num_p, 1, cpad), jnp.float32),
            ),
            grid_spec=pltpu.PrefetchScalarGridSpec(
                num_scalar_prefetch=0,
                grid=(n, num_p),
                in_specs=[
                    pl.BlockSpec((None, tile_p, k), lambda i, j: (i, j, 0)),
                    w_spec,
                ],
                out_specs=(
                    pl.BlockSpec((None, tile_p, cpad), lambda i, j: (i, j, 0)),
                    pl.BlockSpec((None, None, 1, cpad), lambda i, j: (i, j, 0, 0)),
                    pl.BlockSpec((None, None, 1, cpad), lambda i, j: (i, j, 0, 0)),
                ),
            ),
            compiler_params=pltpu.CompilerParams(
                dimension_semantics=("parallel", "parallel"),
                vmem_limit_bytes=vmem_limit),
        )(patches, w_mat)

        # Tiny XLA epilogue: fold partials into per-(sample, channel) scale/shift.
        mean = jnp.sum(psum, axis=(1, 2)) / float(p)            # (N, Cpad)
        ex2 = jnp.sum(psq, axis=(1, 2)) / float(p)
        var = jnp.maximum(ex2 - mean * mean, 0.0)               # biased, like IN2d
        inv = lax.rsqrt(var + EPS)
        scale = inv[:, None, :]                                 # (N, 1, Cpad)
        shift = (-mean * inv)[:, None, :]

        out = pl.pallas_call(
            _norm_lrelu_kernel,
            out_shape=jax.ShapeDtypeStruct((n, p_pad, cpad), jnp.float32),
            grid_spec=pltpu.PrefetchScalarGridSpec(
                num_scalar_prefetch=0,
                grid=(n, num_p),
                in_specs=[
                    pl.BlockSpec((None, tile_p, cpad), lambda i, j: (i, j, 0)),
                    pl.BlockSpec((None, 1, cpad), lambda i, j: (i, 0, 0)),
                    pl.BlockSpec((None, 1, cpad), lambda i, j: (i, 0, 0)),
                ],
                out_specs=pl.BlockSpec((None, tile_p, cpad), lambda i, j: (i, j, 0)),
            ),
            compiler_params=pltpu.CompilerParams(
                dimension_semantics=("parallel", "parallel"),
                vmem_limit_bytes=vmem_limit),
        )(y, scale, shift)

    out = out[:, :p, :cout].reshape(n, h_out, w_out, cout)
    # TODO(synk): an NHWC/bf16 consumer could skip this transpose; kept for parity
    # with the PyTorch NCHW module.
    return jnp.transpose(out, (0, 3, 1, 2)).astype(out_dtype)


def _reference(x, weight, bias, stride):
    # Conv2d(k=4, pad=1, stride) -> InstanceNorm2d -> LeakyReLU(0.2); inputs rounded
    # through bf16 to match the kernel's matmul operand precision.
    xb = x.astype(jnp.bfloat16).astype(jnp.float32)
    wb = weight.astype(jnp.bfloat16).astype(jnp.float32)
    y = lax.conv_general_dilated(
        xb, wb, (stride, stride), [(PAD, PAD), (PAD, PAD)],
        dimension_numbers=("NCHW", "OIHW", "NCHW"),
        precision=lax.Precision.HIGHEST)
    y = y + bias[None, :, None, None]
    mean = y.mean(axis=(2, 3), keepdims=True)
    var = y.var(axis=(2, 3), keepdims=True)                     # biased, like IN2d
    yn = (y - mean) / jnp.sqrt(var + EPS)
    return jnp.where(yn >= 0, yn, NEG_SLOPE * yn)


if __name__ == "__main__":
    key = jax.random.PRNGKey(0)
    kx, kw_key, kb = jax.random.split(key, 3)

    N, Cin, H, W = 2, 4, 16, 16
    Cout, stride = 8, 2

    x = jax.random.normal(kx, (N, Cin, H, W), dtype=jnp.float32)
    fan_in = Cin * KH * KW
    weight = jax.random.normal(kw_key, (Cout, Cin, KH, KW),
                               dtype=jnp.float32) / jnp.sqrt(fan_in)
    bias = jax.random.normal(kb, (Cout,), dtype=jnp.float32) * 0.1

    ref = _reference(x, weight, bias, stride)

    # Fused single-pass path (default for shapes whose (P, Cpad) slab fits in VMEM).
    out = jax.block_until_ready(conv_layer_forward(x, weight, bias, stride=stride))
    assert out.shape == ref.shape, (out.shape, ref.shape)
    max_err = float(jnp.abs(out - ref).max())
    assert jnp.allclose(out, ref, atol=3e-3, rtol=3e-3), max_err

    # Tiled two-pass fallback (bf16 y intermediate -> slightly looser tolerance).
    out_t = jax.block_until_ready(
        conv_layer_forward(x, weight, bias, stride=stride, force_tiled=True))
    max_err_t = float(jnp.abs(out_t - ref).max())
    assert jnp.allclose(out_t, ref, atol=1e-2, rtol=1e-2), max_err_t

    print("KERNEL_OK")
</pallas_src>

<mosaic_0001>
module attributes {stable_mosaic.version = 11 : i64} {
  func.func @_fused_conv_in_lrelu_kernel(%arg0: i32, %arg1: memref<1x64x64xbf16, #tpu.memory_space<vmem>>, %arg2: memref<64x128xbf16, #tpu.memory_space<vmem>>, %arg3: memref<1x64x128xf32, #tpu.memory_space<vmem>>) attributes {dimension_semantics = [#tpu.dimension_semantics<parallel>], iteration_bounds = array<i64: 2>, scalar_prefetch = 0 : i64, scratch_operands = 0 : i64, tpu.core_type = #tpu.core_type<tc>, window_params = [{transform_indices = @transform_0, window_bounds = array<i64: 1, 64, 64>}, {pipeline_mode = #tpu.pipeline_mode<synchronous>, transform_indices = @transform_1, window_bounds = array<i64: 64, 128>}, {transform_indices = @transform_2, window_bounds = array<i64: 1, 64, 128>}]} {
    %c0 = arith.constant 0 : index
    %c0_0 = arith.constant 0 : index
    %c0_1 = arith.constant 0 : index
    %0 = vector.load %arg1[%c0, %c0_0, %c0_1] : memref<1x64x64xbf16, #tpu.memory_space<vmem>>, vector<1x64x64xbf16>
    %1 = vector.shape_cast %0 : vector<1x64x64xbf16> to vector<64x64xbf16>
    %c0_2 = arith.constant 0 : index
    %c0_3 = arith.constant 0 : index
    %2 = vector.load %arg2[%c0_2, %c0_3] : memref<64x128xbf16, #tpu.memory_space<vmem>>, vector<64x128xbf16>
    %cst = arith.constant dense<0.000000e+00> : vector<64x128xf32>
    %3 = tpu.matmul %1, %2, %cst {dimension_numbers = #tpu.dot_dimension_numbers<[1], [0], [0], [1], [0, 0, 1, 1], [], []>} : vector<64x64xbf16>, vector<64x128xbf16>, vector<64x128xf32> -> vector<64x128xf32>
    %cst_4 = arith.constant dense<0.000000e+00> : vector<128xf32>
    %4 = vector.multi_reduction <add>, %3, %cst_4 [0] : vector<64x128xf32> to vector<128xf32>
    %5 = vector.shape_cast %4 : vector<128xf32> to vector<1x128xf32>
    %6 = arith.mulf %3, %3 : vector<64x128xf32>
    %cst_5 = arith.constant dense<0.000000e+00> : vector<128xf32>
    %7 = vector.multi_reduction <add>, %6, %cst_5 [0] : vector<64x128xf32> to vector<128xf32>
    %8 = vector.shape_cast %7 : vector<128xf32> to vector<1x128xf32>
    %cst_6 = arith.constant 1.562500e-02 : f32
    %9 = vector.broadcast %cst_6 : f32 to vector<1x128xf32>
    %10 = arith.mulf %5, %9 : vector<1x128xf32>
    %cst_7 = arith.constant 1.562500e-02 : f32
    %11 = vector.broadcast %cst_7 : f32 to vector<1x128xf32>
    %12 = arith.mulf %8, %11 : vector<1x128xf32>
    %13 = arith.mulf %10, %10 : vector<1x128xf32>
    %14 = arith.subf %12, %13 : vector<1x128xf32>
    %cst_8 = arith.constant 0.000000e+00 : f32
    %15 = vector.broadcast %cst_8 : f32 to vector<1x128xf32>
    %16 = arith.maximumf %14, %15 : vector<1x128xf32>
    %cst_9 = arith.constant 9.99999974E-6 : f32
    %17 = vector.broadcast %cst_9 : f32 to vector<1x128xf32>
    %18 = arith.addf %16, %17 : vector<1x128xf32>
    %19 = math.rsqrt %18 : vector<1x128xf32>
    %20 = vector.broadcast %10 : vector<1x128xf32> to vector<64x128xf32>
    %21 = arith.subf %3, %20 : vector<64x128xf32>
    %22 = vector.broadcast %19 : vector<1x128xf32> to vector<64x128xf32>
    %23 = arith.mulf %21, %22 : vector<64x128xf32>
    %cst_10 = arith.constant 0.000000e+00 : f32
    %24 = vector.broadcast %cst_10 : f32 to vector<64x128xf32>
    %25 = arith.cmpf oge, %23, %24 : vector<64x128xf32>
    %cst_11 = arith.constant 2.000000e-01 : f32
    %26 = vector.broadcast %cst_11 : f32 to vector<64x128xf32>
    %27 = arith.mulf %26, %23 : vector<64x128xf32>
    %28 = arith.select %25, %23, %27 : vector<64x128xi1>, vector<64x128xf32>
    %c0_12 = arith.constant 0 : index
    %c0_13 = arith.constant 0 : index
    %c0_14 = arith.constant 0 : index
    %29 = vector.load %arg3[%c0_12, %c0_13, %c0_14] : memref<1x64x128xf32, #tpu.memory_space<vmem>>, vector<1x64x128xf32>
    %30 = vector.shape_cast %29 : vector<1x64x128xf32> to vector<64x128xf32>
    %31 = vector.shape_cast %28 : vector<64x128xf32> to vector<1x64x128xf32>
    tpu.vector_store %arg3[%c0_12, %c0_13, %c0_14], %31 {strides = array<i32>} : memref<1x64x128xf32, #tpu.memory_space<vmem>>, vector<1x64x128xf32>,
    return
  }
  func.func @transform_0(%arg0: i32) -> (i32, i32, i32) {
    %c0_i32 = arith.constant 0 : i32
    %c0_i32_0 = arith.constant 0 : i32
    %c0_i32_1 = arith.constant 0 : i32
    return %arg0, %c0_i32, %c0_i32_0 : i32, i32, i32
  }
  func.func @transform_1(%arg0: i32) -> (i32, i32) {
    %c0_i32 = arith.constant 0 : i32
    %c0_i32_0 = arith.constant 0 : i32
    %c0_i32_1 = arith.constant 0 : i32
    return %c0_i32, %c0_i32_0 : i32, i32
  }
  func.func @transform_2(%arg0: i32) -> (i32, i32, i32) {
    %c0_i32 = arith.constant 0 : i32
    %c0_i32_0 = arith.constant 0 : i32
    %c0_i32_1 = arith.constant 0 : i32
    return %arg0, %c0_i32, %c0_i32_0 : i32, i32, i32
  }
}

</mosaic_0001>

<llo_original>
// kernel: conv_layer_forward.1
$region0: #{conv_layer_forward.1}
  #allocation0 [shape = 'u32[]', space=smem, size = 0x4, offset = 0x4, fixed_abs, tag = 'smem constant byte address 0x4 - core index']
  #allocation1 [shape = 'u32[144,128]{1,0:T(1,128)}', space=vmem, size = 0x12000, scoped, tag = 'internal scratch']
  %s0 = inlined_call_operand.vmem [shape: bf16[2,64,64], index: 0, kind: input, shape index: {}]
  %s1 = inlined_call_operand.vmem [shape: bf16[64,128], index: 1, kind: input, shape index: {}]
  %s2 = inlined_call_operand.vmem [shape: f32[2,64,128], index: 2, kind: output, shape index: {}]
  %s3 = sld [smem:[#allocation0]]
  $region41: #{conv_layer_forward.1} parent=0
    _
  %s5 = ssub.s32 1, %s3
  %s6 = scalar_select 0, %s5, %s3
  loop: start=0, step=1, limit=4
  $region2: #{conv_layer_forward.1} parent=0 // loop_pre_header
    _
  $region3: #{conv_layer_forward.1} parent=0 // loop_header
    %s8 = sphi 0, %s12
    %p9 = scmp.ge.s32.totalorder %s8, 4
    %s18 = sphi 0, %s20
    %s21 = sphi 0, %s18
    %s22 = sphi 0, %s21
    %s38 = sphi 0, %s22
    %s42 = sphi 0, %s42
    %s44 = sphi 0, %s42
    %s45 = sphi 0, %s44
    %s59 = sphi 0, %s45
    %s65 = sphi 0, %s67
    %s68 = sphi 0, %s65
    %s69 = sphi 0, %s68
    %s85 = sphi 0, %s69
  $region4: #{conv_layer_forward.1} parent=0 // loop_header_branch
    %11 = sbr.rel (%p9) target = $region8
  $region5: #{conv_layer_forward.1} parent=0 // loop_body
    %s13 = ssub.s32 %s8, 1
    %s14 = ssub.s32 %s8, 2
    %s15 = sadd.s32 %s8, 1
    %s16 = ssub.s32 %s8, %s15
    %p17 = scmp.eq.s32.totalorder %s16, 0
    %s19 = sadd.s32 %s18, 1
    %s20 = scalar_select %p17, %s18, %s19
    %p23 = pneg %p17
    %p24 = scmp.eq.s32.totalorder %s8, 1
    %p25 = por %p23, %p24
    %p26 = scmp.ne.s32.totalorder %s18, %s21
    %p27 = scmp.eq.s32.totalorder %s8, 0
    %p28 = por %p26, %p27
    %p29 = scmp.ne.s32.totalorder %s18, %s21
    %p30 = scmp.eq.s32.totalorder %s13, 1
    %p31 = por %p29, %p30
    %p32 = scmp.ne.s32.totalorder %s21, %s22
    %p33 = scmp.eq.s32.totalorder %s13, 0
    %p34 = por %p32, %p33
    %p35 = scmp.ne.s32.totalorder %s21, %s22
    %p36 = scmp.eq.s32.totalorder %s14, 1
    %p37 = por %p35, %p36
    %p39 = scmp.ne.s32.totalorder %s22, %s38
    %p40 = scmp.eq.s32.totalorder %s14, 0
    %p41 = por %p39, %p40
    %s43 = sadd.s32 %s42, 1
    %p46 = scmp.eq.s32.totalorder %s8, 1
    %p47 = scmp.ne.s32.totalorder %s42, %s44
    %p48 = scmp.eq.s32.totalorder %s8, 0
    %p49 = por %p47, %p48
    %p50 = scmp.ne.s32.totalorder %s42, %s44
    %p51 = scmp.eq.s32.totalorder %s13, 1
    %p52 = por %p50, %p51
    %p53 = scmp.ne.s32.totalorder %s44, %s45
    %p54 = scmp.eq.s32.totalorder %s13, 0
    %p55 = por %p53, %p54
    %p56 = scmp.ne.s32.totalorder %s44, %s45
    %p57 = scmp.eq.s32.totalorder %s14, 1
    %p58 = por %p56, %p57
    %p60 = scmp.ne.s32.totalorder %s45, %s59
    %p61 = scmp.eq.s32.totalorder %s14, 0
    %p62 = por %p60, %p61
    %s63 = ssub.s32 %s8, %s15
    %p64 = scmp.eq.s32.totalorder %s63, 0
    %s66 = sadd.s32 %s65, 1
    %s67 = scalar_select %p64, %s65, %s66
    %p70 = pneg %p64
    %p71 = scmp.eq.s32.totalorder %s8, 1
    %p72 = por %p70, %p71
    %p73 = scmp.ne.s32.totalorder %s65, %s68
    %p74 = scmp.eq.s32.totalorder %s8, 0
    %p75 = por %p73, %p74
    %p76 = scmp.ne.s32.totalorder %s65, %s68
    %p77 = scmp.eq.s32.totalorder %s13, 1
    %p78 = por %p76, %p77
    %p79 = scmp.ne.s32.totalorder %s68, %s69
    %p80 = scmp.eq.s32.totalorder %s13, 0
    %p81 = por %p79, %p80
    %p82 = scmp.ne.s32.totalorder %s68, %s69
    %p83 = scmp.eq.s32.totalorder %s14, 1
    %p84 = por %p82, %p83
    %p86 = scmp.ne.s32.totalorder %s69, %s85
    %p87 = scmp.eq.s32.totalorder %s14, 0
    %p88 = por %p86, %p87
    %p89 = scmp.le.s32.totalorder 1, %s8
    %p90 = scmp.lt.s32.totalorder %s8, 3
    %p91 = pnand %p89, %p90
    %p92 = pneg %p91
    // Predicated region
    $region9: #{conv_layer_forward.1} parent=5 // pred_check
      _
    $region10: #{conv_layer_forward.1} parent=5 // pred_check_branch
      %94 = sbr.rel (%p91) target = $region12
    $region11: #{conv_layer_forward.1} parent=5 // pred_region
      %s95 = ssub.s32 %s8, 1
      // Predicated region
      $region13: #{conv_layer_forward.1} parent=11 // pred_check
        %p96 = pneg %p55
      $region14: #{conv_layer_forward.1} parent=11 // pred_check_branch
        %98 = sbr.rel (%p96) target = $region16
      $region15: #{conv_layer_forward.1} parent=11 // pred_region
        _
      $region16: #{conv_layer_forward.1} parent=11 // pred_fallthru
        _
    $region12: #{conv_layer_forward.1} parent=5 // pred_fallthru
      _
    %p99 = scmp.lt.s32.totalorder %s8, 2
    // Predicated region
    $region17: #{conv_layer_forward.1} parent=5 // pred_check
      %p100 = pneg %p99
    $region18: #{conv_layer_forward.1} parent=5 // pred_check_branch
      %102 = sbr.rel (%p100) target = $region20
    $region19: #{conv_layer_forward.1} parent=5 // pred_region
      // Predicated region
      $region21: #{conv_layer_forward.1} parent=19 // pred_check
        %p103 = pneg %p28
      $region22: #{conv_layer_forward.1} parent=19 // pred_check_branch
        %105 = sbr.rel (%p103) target = $region24
      $region23: #{conv_layer_forward.1} parent=19 // pred_region
        %p106 = scmp.lt.s32.totalorder %s8, 1
        %s107 = scalar_select %p106, %s8, 1
        %s108 = smul.addr %s107, 8
        %s109 = smul.addr %s108, 4
        %s110 = scalar_lea.vmem %s0, %s109
      $region24: #{conv_layer_forward.1} parent=19 // pred_fallthru
        _
    $region20: #{conv_layer_forward.1} parent=5 // pred_fallthru
      _
    %p111 = scmp.le.s32.totalorder 1, %s8
    %p112 = scmp.lt.s32.totalorder %s8, 3
    %p113 = pnand %p111, %p112
    %p114 = pneg %p113
    // Predicated region
    $region25: #{conv_layer_forward.1} parent=5 // pred_check
      _
    $region26: #{conv_layer_forward.1} parent=5 // pred_check_branch
      %116 = sbr.rel (%p113) target = $region28
    $region27: #{conv_layer_forward.1} parent=5 // pred_region
      %s117 = ssub.s32 %s8, 1
      %p118 = scmp.lt.s32.totalorder %s13, 1
      %s119 = scalar_select %p118, %s13, 1
      %s120 = smul.addr %s119, 8
      %s121 = smul.addr %s120, 4
      %s122 = scalar_lea.vmem %s0, %s121
      %p123 = pneg %p34
      %p124 = pneg %p31
      %p125 = pneg %p55
      %p126 = pneg %p52
      %p127 = pneg %p81
      %p128 = pneg %p78
      %p129 = scmp.lt.s32.totalorder %s13, 1
      %s130 = scalar_select %p129, %s13, 1
      %s131 = smul.addr %s130, 8
      %s132 = smul.addr %s131, 8
      %s133 = scalar_lea.vmem %s2, %s132
      %p134 = scmp.lt.s32.totalorder %s13, 1
      %s135 = scalar_select %p134, %s13, 1
      %s136 = smul.addr %s135, 8
      %s137 = smul.addr %s136, 4
      %s138 = scalar_lea.vmem %s0, %s137
      %p139 = scmp.lt.s32.totalorder %s13, 1
      %s140 = scalar_select %p139, %s13, 1
      %s141 = smul.addr %s140, 8
      %s142 = smul.addr %s141, 8
      %s143 = scalar_lea.vmem %s2, %s142
      %v145 = vld [vmem:[%s138] sm:$0xf]
      %v146 = vld [vmem:[%s138 + $0x4] sm:$0xf]
      %v147 = vld [vmem:[%s138 + $0x8] sm:$0xf]
      %v148 = vld [vmem:[%s138 + $0xc] sm:$0xf]
      %v149 = vld [vmem:[%s138 + $0x10] sm:$0xf]
      %v150 = vld [vmem:[%s138 + $0x14] sm:$0xf]
      %v151 = vld [vmem:[%s138 + $0x18] sm:$0xf]
      %v152 = vld [vmem:[%s138 + $0x1c] sm:$0xf]
      %v153 = vld [vmem:[%s1] sm:$0xf]
      %v154 = vld [vmem:[%s1 + $0x4] sm:$0xf]
      %v155 = vld [vmem:[%s1 + $0x8] sm:$0xf]
      %v156 = vld [vmem:[%s1 + $0xc] sm:$0xf]
      %v157 = vld [vmem:[%s1 + $0x10] sm:$0xf]
      %v158 = vld [vmem:[%s1 + $0x14] sm:$0xf]
      %v159 = vld [vmem:[%s1 + $0x18] sm:$0xf]
      %v160 = vld [vmem:[%s1 + $0x1c] sm:$0xf]
      %v169 = vunpack.c.l.b16 %v145
      %v170 = vunpack.c.l.b16 %v146
      %v171 = vunpack.c.l.b16 %v147
      %v172 = vunpack.c.l.b16 %v148
      %v173 = vunpack.c.l.b16 %v149
      %v174 = vunpack.c.l.b16 %v150
      %v175 = vunpack.c.l.b16 %v151
      %v176 = vunpack.c.l.b16 %v152
      %v177 = vpack.c.b16 %v170, %v169
      %v178 = vpack.c.b16 %v172, %v171
      %v179 = vpack.c.b16 %v174, %v173
      %v180 = vpack.c.b16 %v176, %v175
      %v189 = vunpack.c.l.b16 %v153
      %v190 = vunpack.c.l.b16 %v154
      %v191 = vunpack.c.l.b16 %v155
      %v192 = vunpack.c.l.b16 %v156
      %v193 = vunpack.c.l.b16 %v157
      %v194 = vunpack.c.l.b16 %v158
      %v195 = vunpack.c.l.b16 %v159
      %v196 = vunpack.c.l.b16 %v160
      %v197 = vpack.c.b16 %v190, %v189
      %v198 = vpack.c.b16 %v192, %v191
      %v199 = vpack.c.b16 %v194, %v193
      %v200 = vpack.c.b16 %v196, %v195
      %vm205 = vcmask 523264
      %v207 = vsel %vm205, %v177, 0
      %v210 = vsel %vm205, %v178, 0
      %v213 = vsel %vm205, %v179, 0
      %v216 = vsel %vm205, %v180, 0
      %218 = vmatprep.subr.bf16.mxu0 0
      %219 = vmatpush1.bf16.msra.mxu0 0
      %220 = vmatprep.subr.bf16.mxu0 0
      %221 = vmatpush1.bf16.msra.mxu0 0
      %222 = vmatprep.subr.bf16.mxu0 0
      %223 = vmatpush1.bf16.msra.mxu0 0
      %224 = vmatprep.subr.bf16.mxu0 0
      %225 = vmatpush1.bf16.msra.mxu0 0
      %226 = vmatprep.subr.bf16.mxu0 0
      %227 = vmatpush1.bf16.msra.mxu0 %v200
      %228 = vmatprep.subr.bf16.mxu0 0
      %229 = vmatpush1.bf16.msra.mxu0 %v199
      %230 = vmatprep.subr.bf16.mxu0 0
      %231 = vmatpush1.bf16.msra.mxu0 %v198
      %232 = vmatprep.subr.bf16.mxu0 0
      %233 = vmatpush1.bf16.msra.mxu0 %v197
      %234 = vmatprep.subr.bf16.mxu0 0
      %235 = vmatpush2.bf16.msra.mxu0 0
      %236 = vmatprep.subr.bf16.mxu0 0
      %237 = vmatpush2.bf16.msra.mxu0 0
      %238 = vmatprep.subr.bf16.mxu0 0
      %239 = vmatpush2.bf16.msra.mxu0 0
      %240 = vmatprep.subr.bf16.mxu0 0
      %241 = vmatpush2.bf16.msra.mxu0 0
      %242 = vmatprep.subr.bf16.mxu0 0
      %243 = vmatpush2.bf16.msra.mxu0 0
      %244 = vmatprep.subr.bf16.mxu0 0
      %245 = vmatpush2.bf16.msra.mxu0 0
      %246 = vmatprep.subr.bf16.mxu0 0
      %247 = vmatpush2.bf16.msra.mxu0 0
      %248 = vmatprep.subr.bf16.mxu0 0
      %249 = vmatpush2.bf16.msra.mxu0 0
      %250 = vmatprep.mubr.bf16.mxu0 0
      %251 = vmatmul.mubr.bf16.gmra.mxu0 %v207
      %v252 = vpop.f32.mrf.mxu0
      %v253 = vadd.f32 0.0, %v252
      %v254 = vpop.f32.mrf.mxu0
      %v255 = vpop.f32.mrf.mxu0
      %v256 = vadd.f32 0.0, %v255
      %v257 = vpop.f32.mrf.mxu0
      %258 = vmatprep.mubr.bf16.mxu0 0
      %259 = vmatmul.mubr.bf16.gmra.mxu0 %v210
      %v260 = vpop.f32.mrf.mxu0
      %v261 = vadd.f32 0.0, %v260
      %v262 = vpop.f32.mrf.mxu0
      %v263 = vpop.f32.mrf.mxu0
      %v264 = vadd.f32 0.0, %v263
      %v265 = vpop.f32.mrf.mxu0
      %266 = vmatprep.mubr.bf16.mxu0 0
      %267 = vmatmul.mubr.bf16.gmra.mxu0 %v213
      %v268 = vpop.f32.mrf.mxu0
      %v269 = vadd.f32 0.0, %v268
      %v270 = vpop.f32.mrf.mxu0
      %v271 = vpop.f32.mrf.mxu0
      %v272 = vadd.f32 0.0, %v271
      %v273 = vpop.f32.mrf.mxu0
      %274 = vmatprep.mubr.bf16.mxu0 0
      %275 = vmatmul.mubr.bf16.gmra.mxu0 %v216
      %v276 = vpop.f32.mrf.mxu0
      %v277 = vadd.f32 0.0, %v276
      %v278 = vpop.f32.mrf.mxu0
      %v279 = vpop.f32.mrf.mxu0
      %v280 = vadd.f32 0.0, %v279
      %v281 = vpop.f32.mrf.mxu0
      %282 = vdwg.mxu0
      %v283 = vadd.f32 %v253, %v256
      %v284 = vadd.f32 %v283, %v261
      %v285 = vadd.f32 %v284, %v264
      %v286 = vadd.f32 %v285, %v269
      %v287 = vadd.f32 %v286, %v272
      %v288 = vadd.f32 %v287, %v277
      %v289 = vadd.f32 %v288, %v280
      %v290 = vrot.slane %v289, 4
      %v291 = vadd.f32 %v289, %v290
      %v292 = vrot.slane %v291, 2
      %v293 = vadd.f32 %v291, %v292
      %v294 = vrot.slane %v293, 1
      %v295 = vadd.f32 %v293, %v294
      %v296 = vmul.f32 %v253, %v253
      %v297 = vmul.f32 %v256, %v256
      %v298 = vmul.f32 %v261, %v261
      %v299 = vmul.f32 %v264, %v264
      %v300 = vmul.f32 %v269, %v269
      %v301 = vmul.f32 %v272, %v272
      %v302 = vmul.f32 %v277, %v277
      %v303 = vmul.f32 %v280, %v280
      %v304 = vadd.f32 %v296, %v297
      %v305 = vadd.f32 %v304, %v298
      %v306 = vadd.f32 %v305, %v299
      %v307 = vadd.f32 %v306, %v300
      %v308 = vadd.f32 %v307, %v301
      %v309 = vadd.f32 %v308, %v302
      %v310 = vadd.f32 %v309, %v303
      %v311 = vrot.slane %v310, 4
      %v312 = vadd.f32 %v310, %v311
      %v313 = vrot.slane %v312, 2
      %v314 = vadd.f32 %v312, %v313
      %v315 = vrot.slane %v314, 1
      %v316 = vadd.f32 %v314, %v315
      %v317 = vmul.f32 %v295, 0.015625
      %v318 = vmul.f32 %v316, 0.015625
      %v319 = vmul.f32 %v317, %v317
      %v320 = vsub.f32 %v318, %v319
      %v321 = vmax.f32 %v320, 0.0
      %v322 = vadd.f32 %v321, 1e-05
      %v323 = vrsqrt.pop %v322
      %v324 = vsub.f32 %v253, %v317
      %v325 = vsub.f32 %v256, %v317
      %v326 = vsub.f32 %v261, %v317
      %v327 = vsub.f32 %v264, %v317
      %v328 = vsub.f32 %v269, %v317
      %v329 = vsub.f32 %v272, %v317
      %v330 = vsub.f32 %v277, %v317
      %v331 = vsub.f32 %v280, %v317
      %v332 = vmul.f32 %v324, %v323
      %v333 = vmul.f32 %v325, %v323
      %v334 = vmul.f32 %v326, %v323
      %v335 = vmul.f32 %v327, %v323
      %v336 = vmul.f32 %v328, %v323
      %v337 = vmul.f32 %v329, %v323
      %v338 = vmul.f32 %v330, %v323
      %v339 = vmul.f32 %v331, %v323
      %vm340 = vcmp.ge.f32.partialorder %v332, 0.0
      %vm341 = vcmp.ge.f32.partialorder %v333, 0.0
      %vm342 = vcmp.ge.f32.partialorder %v334, 0.0
      %vm343 = vcmp.ge.f32.partialorder %v335, 0.0
      %vm344 = vcmp.ge.f32.partialorder %v336, 0.0
      %vm345 = vcmp.ge.f32.partialorder %v337, 0.0
      %vm346 = vcmp.ge.f32.partialorder %v338, 0.0
      %vm347 = vcmp.ge.f32.partialorder %v339, 0.0
      %v348 = vmul.f32 %v332, 0.2
      %v349 = vmul.f32 %v333, 0.2
      %v350 = vmul.f32 %v334, 0.2
      %v351 = vmul.f32 %v335, 0.2
      %v352 = vmul.f32 %v336, 0.2
      %v353 = vmul.f32 %v337, 0.2
      %v354 = vmul.f32 %v338, 0.2
      %v355 = vmul.f32 %v339, 0.2
      %v356 = vsel %vm340, %v332, %v348
      %v357 = vsel %vm341, %v333, %v349
      %v358 = vsel %vm342, %v334, %v350
      %v359 = vsel %vm343, %v335, %v351
      %v360 = vsel %vm344, %v336, %v352
      %v361 = vsel %vm345, %v337, %v353
      %v362 = vsel %vm346, %v338, %v354
      %v363 = vsel %vm347, %v339, %v355
      %364 = vst [vmem:[%s143] sm:$0xff] %v356
      %365 = vst [vmem:[%s143 + $0x8] sm:$0xff] %v357
      %366 = vst [vmem:[%s143 + $0x10] sm:$0xff] %v358
      %367 = vst [vmem:[%s143 + $0x18] sm:$0xff] %v359
      %368 = vst [vmem:[%s143 + $0x20] sm:$0xff] %v360
      %369 = vst [vmem:[%s143 + $0x28] sm:$0xff] %v361
      %370 = vst [vmem:[%s143 + $0x30] sm:$0xff] %v362
      %371 = vst [vmem:[%s143 + $0x38] sm:$0xff] %v363
      %p372 = scmp.lt.s32.totalorder %s13, 1
      %s373 = scalar_select %p372, %s13, 1
      %s374 = smul.addr %s373, 8
      %s375 = smul.addr %s374, 8
      %s376 = scalar_lea.vmem %s2, %s375
      // Predicated region
      $region29: #{conv_layer_forward.1} parent=27 // pred_check
        %p377 = pneg %p78
      $region30: #{conv_layer_forward.1} parent=27 // pred_check_branch
        %379 = sbr.rel (%p377) target = $region32
      $region31: #{conv_layer_forward.1} parent=27 // pred_region
        _
      $region32: #{conv_layer_forward.1} parent=27 // pred_fallthru
        _
    $region28: #{conv_layer_forward.1} parent=5 // pred_fallthru
      _
    %p380 = scmp.le.s32.totalorder 2, %s8
    // Predicated region
    $region33: #{conv_layer_forward.1} parent=5 // pred_check
      %p381 = pneg %p380
    $region34: #{conv_layer_forward.1} parent=5 // pred_check_branch
      %383 = sbr.rel (%p381) target = $region36
    $region35: #{conv_layer_forward.1} parent=5 // pred_region
      %s384 = ssub.s32 %s8, 2
      // Predicated region
      $region37: #{conv_layer_forward.1} parent=35 // pred_check
        %p385 = pneg %p84
      $region38: #{conv_layer_forward.1} parent=35 // pred_check_branch
        %387 = sbr.rel (%p385) target = $region40
      $region39: #{conv_layer_forward.1} parent=35 // pred_region
        %p388 = scmp.lt.s32.totalorder %s14, 1
        %s389 = scalar_select %p388, %s14, 1
        %s390 = smul.addr %s389, 8
        %s391 = smul.addr %s390, 8
        %s392 = scalar_lea.vmem %s2, %s391
      $region40: #{conv_layer_forward.1} parent=35 // pred_fallthru
        _
    $region36: #{conv_layer_forward.1} parent=5 // pred_fallthru
      _
  $region6: #{conv_layer_forward.1} parent=0 // loop_footer
    %s12 = sadd.s32 1, %s8
  $region7: #{conv_layer_forward.1} parent=0 // loop_footer_branch
    %7 = sbr.rel target = $region3
  $region8: #{conv_layer_forward.1} parent=0 // loop_exit
    _

</llo_original>
